<compile_context>
chip_gen: v7x
topology: tpu7x:2x2x1
jax: 0.10.0
libtpu: 0.0.40
codegen_flags: <defaults>
</compile_context>

<pallas_src>
import functools

import jax
import jax.numpy as jnp
import numpy as np
from jax.experimental import pallas as pl
from jax.experimental.pallas import tpu as pltpu


# ----------------------------------------------------------------------------- #
# Fused kernel: tiled matmul (K-accumulated) + bias + residual + LayerNorm
# ----------------------------------------------------------------------------- #
def _output_kernel(x_ref, w_ref, b_ref, res_ref, g_ref, bt_ref, o_ref, acc_ref, *, eps):
    k = pl.program_id(1)

    @pl.when(k == 0)
    def _():
        acc_ref[...] = jnp.zeros_like(acc_ref)

    acc_ref[...] += jnp.dot(
        x_ref[...], w_ref[...], preferred_element_type=jnp.float32
    )

    @pl.when(k == pl.num_programs(1) - 1)
    def _():
        y = (
            acc_ref[...]
            + b_ref[...].astype(jnp.float32)
            + res_ref[...].astype(jnp.float32)
        )
        mean = jnp.mean(y, axis=-1, keepdims=True)
        centered = y - mean
        var = jnp.mean(centered * centered, axis=-1, keepdims=True)
        inv = jax.lax.rsqrt(var + eps)
        out = centered * inv * g_ref[...].astype(jnp.float32) + bt_ref[...].astype(
            jnp.float32
        )
        o_ref[...] = out.astype(o_ref.dtype)


def _pick_tile(dim, target, align):
    """Largest align-multiple divisor of `dim` that is <= target, else full dim."""
    if dim <= target:
        return dim
    t = (target // align) * align
    while t >= align:
        if dim % t == 0:
            return t
        t -= align
    return dim


def long_skim_output(hidden_states, input_tensor, dense_w, dense_b, ln_gamma, ln_beta,
                     *, eps, tm_target=256, tk_target=512):
    """hidden_states: (B, S, K); input_tensor: (B, S, N) -> (B, S, N).

    dense_w: (K, N), dense_b/ln_gamma/ln_beta: (1, N).
    """
    B, S, K = hidden_states.shape
    N = input_tensor.shape[-1]
    M = B * S

    x2d = hidden_states.reshape(M, K)
    res2d = input_tensor.reshape(M, N)

    # Tile sizes: M tile aligned to sublanes (8), K tile aligned to lanes (128)
    # (or the full dim when it is small). Hidden axis N stays whole so LayerNorm
    # over N fuses into the same kernel and the output store is lane-dense.
    tm = _pick_tile(M, tm_target, 8)
    tk = _pick_tile(K, tk_target, 128)
    grid = (M // tm, K // tk)

    out2d = pl.pallas_call(
        functools.partial(_output_kernel, eps=eps),
        out_shape=jax.ShapeDtypeStruct((M, N), hidden_states.dtype),
        grid_spec=pltpu.PrefetchScalarGridSpec(
            num_scalar_prefetch=0,
            grid=grid,
            in_specs=[
                pl.BlockSpec((tm, tk), lambda i, k: (i, k)),   # x tile
                pl.BlockSpec((tk, N), lambda i, k: (k, 0)),    # W tile (full N)
                pl.BlockSpec((1, N), lambda i, k: (0, 0)),     # bias
                pl.BlockSpec((tm, N), lambda i, k: (i, 0)),    # residual
                pl.BlockSpec((1, N), lambda i, k: (0, 0)),     # LN gamma
                pl.BlockSpec((1, N), lambda i, k: (0, 0)),     # LN beta
            ],
            out_specs=pl.BlockSpec((tm, N), lambda i, k: (i, 0)),
            scratch_shapes=[pltpu.VMEM((tm, N), jnp.float32)],
        ),
        compiler_params=pltpu.CompilerParams(
            dimension_semantics=("parallel", "arbitrary"),
        ),
    )(x2d, dense_w, dense_b, res2d, ln_gamma, ln_beta)

    return out2d.reshape(B, S, N)


# ----------------------------------------------------------------------------- #
# Module wrapper
# ----------------------------------------------------------------------------- #
class LongSkimformerOutputPallas:
    def __init__(self, intermediate_size, hidden_size, layer_norm_eps, key):
        self.eps = float(layer_norm_eps)
        k1, k2, k3, k4 = jax.random.split(key, 4)
        bound = 1.0 / np.sqrt(intermediate_size)
        # torch Linear stores (out, in); keep the transposed (in, out) for x @ W.
        self.dense_w = jax.random.uniform(
            k1, (intermediate_size, hidden_size), jnp.float32, -bound, bound)
        self.dense_b = jax.random.uniform(
            k2, (1, hidden_size), jnp.float32, -bound, bound)
        # random gamma/beta (PyTorch default is ones/zeros) to exercise the affine path.
        self.ln_gamma = 1.0 + 0.1 * jax.random.normal(k3, (1, hidden_size), jnp.float32)
        self.ln_beta = 0.1 * jax.random.normal(k4, (1, hidden_size), jnp.float32)

    def __call__(self, hidden_states, input_tensor):
        """hidden_states: (B, S, intermediate); input_tensor: (B, S, hidden)."""
        return long_skim_output(
            hidden_states, input_tensor,
            self.dense_w, self.dense_b, self.ln_gamma, self.ln_beta,
            eps=self.eps)


# ----------------------------------------------------------------------------- #
# Pure-numpy reference of the same semantics (sanity check)
# ----------------------------------------------------------------------------- #
def _reference(hidden_states, input_tensor, w, b, gamma, beta, eps):
    x = np.asarray(hidden_states, np.float64)
    res = np.asarray(input_tensor, np.float64)
    y = x @ np.asarray(w, np.float64) + np.asarray(b, np.float64)
    y = y + res
    mean = y.mean(-1, keepdims=True)
    var = ((y - mean) ** 2).mean(-1, keepdims=True)
    out = (y - mean) / np.sqrt(var + eps) * np.asarray(gamma, np.float64) \
        + np.asarray(beta, np.float64)
    return out.astype(np.float32)


if __name__ == "__main__":
    key = jax.random.PRNGKey(0)
    k_param, k_hs, k_res = jax.random.split(key, 3)

    # config: batch=2, seq=16, intermediate_size=64, hidden_size=32
    B, S = 2, 16
    intermediate_size, hidden_size = 64, 32
    eps = 1e-12

    module = LongSkimformerOutputPallas(
        intermediate_size=intermediate_size,
        hidden_size=hidden_size,
        layer_norm_eps=eps,
        key=k_param)

    hidden_states = jax.random.normal(k_hs, (B, S, intermediate_size), jnp.float32)
    input_tensor = jax.random.normal(k_res, (B, S, hidden_size), jnp.float32)

    out = module(hidden_states, input_tensor)
    out = jax.block_until_ready(out)

    ref = _reference(hidden_states, input_tensor,
                     module.dense_w, module.dense_b,
                     module.ln_gamma, module.ln_beta, eps)
    assert out.shape == (B, S, hidden_size)
    np.testing.assert_allclose(np.asarray(out), ref, rtol=1e-4, atol=1e-4)

    print("KERNEL_OK")
</pallas_src>

<mosaic_0001>
module attributes {stable_mosaic.version = 11 : i64} {
  func.func @_output_kernel(%arg0: i32, %arg1: i32, %arg2: memref<32x64xf32, #tpu.memory_space<vmem>>, %arg3: memref<64x32xf32, #tpu.memory_space<vmem>>, %arg4: memref<1x32xf32, #tpu.memory_space<vmem>>, %arg5: memref<32x32xf32, #tpu.memory_space<vmem>>, %arg6: memref<1x32xf32, #tpu.memory_space<vmem>>, %arg7: memref<1x32xf32, #tpu.memory_space<vmem>>, %arg8: memref<32x32xf32, #tpu.memory_space<vmem>>, %arg9: memref<32x32xf32, #tpu.memory_space<vmem>>) attributes {dimension_semantics = [#tpu.dimension_semantics<parallel>, #tpu.dimension_semantics<arbitrary>], iteration_bounds = array<i64: 1, 1>, scalar_prefetch = 0 : i64, scratch_operands = 1 : i64, tpu.core_type = #tpu.core_type<tc>, window_params = [{transform_indices = @transform_0, window_bounds = array<i64: 32, 64>}, {transform_indices = @transform_1, window_bounds = array<i64: 64, 32>}, {pipeline_mode = #tpu.pipeline_mode<synchronous>, transform_indices = @transform_2, window_bounds = array<i64: 1, 32>}, {transform_indices = @transform_3, window_bounds = array<i64: 32, 32>}, {pipeline_mode = #tpu.pipeline_mode<synchronous>, transform_indices = @transform_4, window_bounds = array<i64: 1, 32>}, {pipeline_mode = #tpu.pipeline_mode<synchronous>, transform_indices = @transform_5, window_bounds = array<i64: 1, 32>}, {transform_indices = @transform_6, window_bounds = array<i64: 32, 32>}]} {
    %c0_i32 = arith.constant 0 : i32
    %0 = arith.cmpi eq, %arg1, %c0_i32 : i32
    %1 = arith.extui %0 : i1 to i32
    %c0_i32_0 = arith.constant 0 : i32
    %2 = arith.cmpi ne, %1, %c0_i32_0 : i32
    scf.if %2 {
      %cst_10 = arith.constant 0.000000e+00 : f32
      %12 = vector.broadcast %cst_10 : f32 to vector<32x32xf32>
      %c0_11 = arith.constant 0 : index
      %c0_12 = arith.constant 0 : index
      %13 = vector.load %arg9[%c0_11, %c0_12] : memref<32x32xf32, #tpu.memory_space<vmem>>, vector<32x32xf32>
      tpu.vector_store %arg9[%c0_11, %c0_12], %12 {strides = array<i32>} : memref<32x32xf32, #tpu.memory_space<vmem>>, vector<32x32xf32>,
    } else {
    }
    %c0 = arith.constant 0 : index
    %c0_1 = arith.constant 0 : index
    %3 = vector.load %arg9[%c0, %c0_1] : memref<32x32xf32, #tpu.memory_space<vmem>>, vector<32x32xf32>
    %c0_2 = arith.constant 0 : index
    %c0_3 = arith.constant 0 : index
    %4 = vector.load %arg2[%c0_2, %c0_3] : memref<32x64xf32, #tpu.memory_space<vmem>>, vector<32x64xf32>
    %c0_4 = arith.constant 0 : index
    %c0_5 = arith.constant 0 : index
    %5 = vector.load %arg3[%c0_4, %c0_5] : memref<64x32xf32, #tpu.memory_space<vmem>>, vector<64x32xf32>
    %cst = arith.constant dense<0.000000e+00> : vector<32x32xf32>
    %6 = tpu.matmul %4, %5, %cst {dimension_numbers = #tpu.dot_dimension_numbers<[1], [0], [0], [1], [0, 0, 1, 1], [], []>} : vector<32x64xf32>, vector<64x32xf32>, vector<32x32xf32> -> vector<32x32xf32>
    %7 = arith.addf %3, %6 : vector<32x32xf32>
    %c0_6 = arith.constant 0 : index
    %c0_7 = arith.constant 0 : index
    %8 = vector.load %arg9[%c0_6, %c0_7] : memref<32x32xf32, #tpu.memory_space<vmem>>, vector<32x32xf32>
    tpu.vector_store %arg9[%c0_6, %c0_7], %7 {strides = array<i32>} : memref<32x32xf32, #tpu.memory_space<vmem>>, vector<32x32xf32>,
    %c0_i32_8 = arith.constant 0 : i32
    %9 = arith.cmpi eq, %arg1, %c0_i32_8 : i32
    %10 = arith.extui %9 : i1 to i32
    %c0_i32_9 = arith.constant 0 : i32
    %11 = arith.cmpi ne, %10, %c0_i32_9 : i32
    scf.if %11 {
      %c0_10 = arith.constant 0 : index
      %c0_11 = arith.constant 0 : index
      %12 = vector.load %arg9[%c0_10, %c0_11] : memref<32x32xf32, #tpu.memory_space<vmem>>, vector<32x32xf32>
      %c0_12 = arith.constant 0 : index
      %c0_13 = arith.constant 0 : index
      %13 = vector.load %arg4[%c0_12, %c0_13] : memref<1x32xf32, #tpu.memory_space<vmem>>, vector<1x32xf32>
      %14 = vector.broadcast %13 : vector<1x32xf32> to vector<32x32xf32>
      %15 = arith.addf %12, %14 : vector<32x32xf32>
      %c0_14 = arith.constant 0 : index
      %c0_15 = arith.constant 0 : index
      %16 = vector.load %arg5[%c0_14, %c0_15] : memref<32x32xf32, #tpu.memory_space<vmem>>, vector<32x32xf32>
      %17 = arith.addf %15, %16 : vector<32x32xf32>
      %cst_16 = arith.constant dense<0.000000e+00> : vector<32xf32>
      %18 = vector.multi_reduction <add>, %17, %cst_16 [1] : vector<32x32xf32> to vector<32xf32>
      %19 = vector.shape_cast %18 : vector<32xf32> to vector<32x1xf32>
      %cst_17 = arith.constant 3.200000e+01 : f32
      %20 = vector.broadcast %cst_17 : f32 to vector<32x1xf32>
      %21 = arith.divf %19, %20 : vector<32x1xf32>
      %22 = vector.broadcast %21 : vector<32x1xf32> to vector<32x32xf32>
      %23 = arith.subf %17, %22 : vector<32x32xf32>
      %24 = arith.mulf %23, %23 : vector<32x32xf32>
      %cst_18 = arith.constant dense<0.000000e+00> : vector<32xf32>
      %25 = vector.multi_reduction <add>, %24, %cst_18 [1] : vector<32x32xf32> to vector<32xf32>
      %26 = vector.shape_cast %25 : vector<32xf32> to vector<32x1xf32>
      %cst_19 = arith.constant 3.200000e+01 : f32
      %27 = vector.broadcast %cst_19 : f32 to vector<32x1xf32>
      %28 = arith.divf %26, %27 : vector<32x1xf32>
      %cst_20 = arith.constant 9.99999996E-13 : f32
      %29 = vector.broadcast %cst_20 : f32 to vector<32x1xf32>
      %30 = arith.addf %28, %29 : vector<32x1xf32>
      %31 = math.rsqrt %30 : vector<32x1xf32>
      %32 = vector.broadcast %31 : vector<32x1xf32> to vector<32x32xf32>
      %33 = arith.mulf %23, %32 : vector<32x32xf32>
      %c0_21 = arith.constant 0 : index
      %c0_22 = arith.constant 0 : index
      %34 = vector.load %arg6[%c0_21, %c0_22] : memref<1x32xf32, #tpu.memory_space<vmem>>, vector<1x32xf32>
      %35 = vector.broadcast %34 : vector<1x32xf32> to vector<32x32xf32>
      %36 = arith.mulf %33, %35 : vector<32x32xf32>
      %c0_23 = arith.constant 0 : index
      %c0_24 = arith.constant 0 : index
      %37 = vector.load %arg7[%c0_23, %c0_24] : memref<1x32xf32, #tpu.memory_space<vmem>>, vector<1x32xf32>
      %38 = vector.broadcast %37 : vector<1x32xf32> to vector<32x32xf32>
      %39 = arith.addf %36, %38 : vector<32x32xf32>
      %c0_25 = arith.constant 0 : index
      %c0_26 = arith.constant 0 : index
      %40 = vector.load %arg8[%c0_25, %c0_26] : memref<32x32xf32, #tpu.memory_space<vmem>>, vector<32x32xf32>
      tpu.vector_store %arg8[%c0_25, %c0_26], %39 {strides = array<i32>} : memref<32x32xf32, #tpu.memory_space<vmem>>, vector<32x32xf32>,
    } else {
    }
    return
  }
  func.func @transform_0(%arg0: i32, %arg1: i32) -> (i32, i32) {
    %c0_i32 = arith.constant 0 : i32
    return %arg0, %arg1 : i32, i32
  }
  func.func @transform_1(%arg0: i32, %arg1: i32) -> (i32, i32) {
    %c0_i32 = arith.constant 0 : i32
    %c0_i32_0 = arith.constant 0 : i32
    return %arg1, %c0_i32 : i32, i32
  }
  func.func @transform_2(%arg0: i32, %arg1: i32) -> (i32, i32) {
    %c0_i32 = arith.constant 0 : i32
    %c0_i32_0 = arith.constant 0 : i32
    %c0_i32_1 = arith.constant 0 : i32
    return %c0_i32, %c0_i32_0 : i32, i32
  }
  func.func @transform_3(%arg0: i32, %arg1: i32) -> (i32, i32) {
    %c0_i32 = arith.constant 0 : i32
    %c0_i32_0 = arith.constant 0 : i32
    return %arg0, %c0_i32 : i32, i32
  }
  func.func @transform_4(%arg0: i32, %arg1: i32) -> (i32, i32) {
    %c0_i32 = arith.constant 0 : i32
    %c0_i32_0 = arith.constant 0 : i32
    %c0_i32_1 = arith.constant 0 : i32
    return %c0_i32, %c0_i32_0 : i32, i32
  }
  func.func @transform_5(%arg0: i32, %arg1: i32) -> (i32, i32) {
    %c0_i32 = arith.constant 0 : i32
    %c0_i32_0 = arith.constant 0 : i32
    %c0_i32_1 = arith.constant 0 : i32
    return %c0_i32, %c0_i32_0 : i32, i32
  }
  func.func @transform_6(%arg0: i32, %arg1: i32) -> (i32, i32) {
    %c0_i32 = arith.constant 0 : i32
    %c0_i32_0 = arith.constant 0 : i32
    return %arg0, %c0_i32 : i32, i32
  }
}

</mosaic_0001>

<llo_original>
// kernel: tpu_custom_call.1
$region0: #{tpu_custom_call.1}
  #allocation0 [shape = 'u32[]', space=smem, size = 0x4, offset = 0x4, fixed_abs, tag = 'smem constant byte address 0x4 - core index']
  #allocation1 [shape = 'u32[144,128]{1,0:T(1,128)}', space=vmem, size = 0x12000, scoped, tag = 'internal scratch']
  #allocation2 [shape = 'f32[32,32]{1,0:T(8,128)}', space=vmem, size = 0x4000, scoped, tag = 'scratch operand']
  %s0 = inlined_call_operand.vmem [shape: f32[32,64], index: 0, kind: input, shape index: {}]
  %s1 = inlined_call_operand.vmem [shape: f32[64,32], index: 1, kind: input, shape index: {}]
  %s2 = inlined_call_operand.vmem [shape: f32[1,32], index: 2, kind: input, shape index: {}]
  %s3 = inlined_call_operand.vmem [shape: f32[32,32], index: 3, kind: input, shape index: {}]
  %s4 = inlined_call_operand.vmem [shape: f32[1,32], index: 4, kind: input, shape index: {}]
  %s5 = inlined_call_operand.vmem [shape: f32[1,32], index: 5, kind: input, shape index: {}]
  %s6 = inlined_call_operand.hbm [shape: f32[32,32], index: 6, kind: output, shape index: {}]
  %s7 = sld [smem:[#allocation0]]
  $region42: #{tpu_custom_call.1} parent=0
    _
  %s9 = ssub.s32 1, %s7
  %s10 = scalar_select 0, %s9, %s7
  $region1: #{tpu_custom_call.1} parent=0
    #allocation3 [shape = 'u8[16384]{0}', space=vmem, size = 0x4000, scoped, tag = 'output window, operand 0, single buffered']
    #allocation4 [shape = 's32[1]{0}', space=sflag, size = 0x4, scoped, tag = 'scoped memory for tpu_custom_call.1']
    %11 = vsyncpa [#allocation4], 0
    // Predicated region
    $region2: #{tpu_custom_call.1} parent=1 // pred_check
      _
    $region3: #{tpu_custom_call.1} parent=1 // pred_check_branch
      %13 = sbr.rel (0) target = $region5
    $region4: #{tpu_custom_call.1} parent=1 // pred_region
      _
    $region5: #{tpu_custom_call.1} parent=1 // pred_fallthru
      _
    // Predicated region
    $region6: #{tpu_custom_call.1} parent=1 // pred_check
      _
    $region7: #{tpu_custom_call.1} parent=1 // pred_check_branch
      %15 = sbr.rel (0) target = $region9
    $region8: #{tpu_custom_call.1} parent=1 // pred_region
      _
    $region9: #{tpu_custom_call.1} parent=1 // pred_fallthru
      _
    // Predicated region
    $region10: #{tpu_custom_call.1} parent=1 // pred_check
      _
    $region11: #{tpu_custom_call.1} parent=1 // pred_check_branch
      %17 = sbr.rel (0) target = $region13
    $region12: #{tpu_custom_call.1} parent=1 // pred_region
      _
    $region13: #{tpu_custom_call.1} parent=1 // pred_fallthru
      _
    // Predicated region
    $region14: #{tpu_custom_call.1} parent=1 // pred_check
      _
    $region15: #{tpu_custom_call.1} parent=1 // pred_check_branch
      %19 = sbr.rel (0) target = $region17
    $region16: #{tpu_custom_call.1} parent=1 // pred_region
      _
    $region17: #{tpu_custom_call.1} parent=1 // pred_fallthru
      _
    // Predicated region
    $region18: #{tpu_custom_call.1} parent=1 // pred_check
      _
    $region19: #{tpu_custom_call.1} parent=1 // pred_check_branch
      %21 = sbr.rel (0) target = $region21
    $region20: #{tpu_custom_call.1} parent=1 // pred_region
      _
    $region21: #{tpu_custom_call.1} parent=1 // pred_fallthru
      _
    // Predicated region
    $region22: #{tpu_custom_call.1} parent=1 // pred_check
      _
    $region23: #{tpu_custom_call.1} parent=1 // pred_check_branch
      %23 = sbr.rel (0) target = $region25
    $region24: #{tpu_custom_call.1} parent=1 // pred_region
      _
    $region25: #{tpu_custom_call.1} parent=1 // pred_fallthru
      _
    %p24 = scmp.eq.s32.totalorder 0, 0
    // Predicated region
    $region26: #{tpu_custom_call.1} parent=1 // pred_check
      %p25 = pneg %p24
    $region27: #{tpu_custom_call.1} parent=1 // pred_check_branch
      %27 = sbr.rel (%p25) target = $region29
    $region28: #{tpu_custom_call.1} parent=1 // pred_region
      %vm28 = vcmask 261120
      %29 = vst.msk [vmem:[#allocation2] sm:$0xff] %vm28, 0.0
      %30 = vst.msk [vmem:[#allocation2 + $0x8] sm:$0xff] %vm28, 0.0
      %31 = vst.msk [vmem:[#allocation2 + $0x10] sm:$0xff] %vm28, 0.0
      %32 = vst.msk [vmem:[#allocation2 + $0x18] sm:$0xff] %vm28, 0.0
    $region29: #{tpu_custom_call.1} parent=1 // pred_fallthru
      _
    %v33 = vld [vmem:[#allocation2] sm:$0xff]
    %v34 = vld [vmem:[#allocation2 + $0x8] sm:$0xff]
    %v35 = vld [vmem:[#allocation2 + $0x10] sm:$0xff]
    %v36 = vld [vmem:[#allocation2 + $0x18] sm:$0xff]
    %v37 = vld [vmem:[%s0] sm:$0xff]
    %v38 = vld [vmem:[%s0 + $0x8] sm:$0xff]
    %v39 = vld [vmem:[%s0 + $0x10] sm:$0xff]
    %v40 = vld [vmem:[%s0 + $0x18] sm:$0xff]
    %v41 = vld [vmem:[%s1] sm:$0xff]
    %v42 = vld [vmem:[%s1 + $0x8] sm:$0xff]
    %v43 = vld [vmem:[%s1 + $0x10] sm:$0xff]
    %v44 = vld [vmem:[%s1 + $0x18] sm:$0xff]
    %v45 = vld [vmem:[%s1 + $0x20] sm:$0xff]
    %v46 = vld [vmem:[%s1 + $0x28] sm:$0xff]
    %v47 = vld [vmem:[%s1 + $0x30] sm:$0xff]
    %v48 = vld [vmem:[%s1 + $0x38] sm:$0xff]
    %vm49 = vcmask 523264
    %v51 = vsel %vm49, %v37, 0
    %v54 = vsel %vm49, %v38, 0
    %v57 = vsel %vm49, %v39, 0
    %v60 = vsel %vm49, %v40, 0
    %62 = vmatprep.subr.mxu0 0.0
    %63 = vmatpush1.msra.mxu0 %v41
    %64 = vmatprep.subr.mxu0 0.0
    %65 = vmatpush1.msra.mxu0 %v42
    %66 = vmatprep.subr.mxu0 0.0
    %67 = vmatpush1.msra.mxu0 %v43
    %68 = vmatprep.subr.mxu0 0.0
    %69 = vmatpush1.msra.mxu0 %v44
    %70 = vmatprep.subr.mxu0 0.0
    %71 = vmatpush1.msra.mxu0 %v45
    %72 = vmatprep.subr.mxu0 0.0
    %73 = vmatpush1.msra.mxu0 %v46
    %74 = vmatprep.subr.mxu0 0.0
    %75 = vmatpush1.msra.mxu0 %v47
    %76 = vmatprep.subr.mxu0 0.0
    %77 = vmatpush1.msra.mxu0 %v48
    %78 = vmatprep.subr.mxu0 0.0
    %79 = vmatpush1.msra.mxu0 0.0
    %80 = vmatprep.subr.mxu0 0.0
    %81 = vmatpush1.msra.mxu0 0.0
    %82 = vmatprep.subr.mxu0 0.0
    %83 = vmatpush1.msra.mxu0 0.0
    %84 = vmatprep.subr.mxu0 0.0
    %85 = vmatpush1.msra.mxu0 0.0
    %86 = vmatprep.subr.mxu0 0.0
    %87 = vmatpush1.msra.mxu0 0.0
    %88 = vmatprep.subr.mxu0 0.0
    %89 = vmatpush1.msra.mxu0 0.0
    %90 = vmatprep.subr.mxu0 0.0
    %91 = vmatpush1.msra.mxu0 0.0
    %92 = vmatprep.subr.mxu0 0.0
    %93 = vmatpush1.msra.mxu0 0.0
    %94 = vmatprep.subr.mxu0 0.0
    %95 = vmatpush1.msra.mxu0 0.0
    %96 = vmatprep.subr.mxu0 0.0
    %97 = vmatpush1.msra.mxu0 0.0
    %98 = vmatprep.subr.mxu0 0.0
    %99 = vmatpush1.msra.mxu0 0.0
    %100 = vmatprep.subr.mxu0 0.0
    %101 = vmatpush1.msra.mxu0 0.0
    %102 = vmatprep.subr.mxu0 0.0
    %103 = vmatpush1.msra.mxu0 0.0
    %104 = vmatprep.subr.mxu0 0.0
    %105 = vmatpush1.msra.mxu0 0.0
    %106 = vmatprep.subr.mxu0 0.0
    %107 = vmatpush1.msra.mxu0 0.0
    %108 = vmatprep.subr.mxu0 0.0
    %109 = vmatpush1.msra.mxu0 0.0
    %110 = vmatprep.subr.mxu0 0.0
    %111 = vmatpush1.msra.mxu0 0.0
    %112 = vmatprep.subr.mxu0 0.0
    %113 = vmatpush1.msra.mxu0 0.0
    %114 = vmatprep.subr.mxu0 0.0
    %115 = vmatpush1.msra.mxu0 0.0
    %116 = vmatprep.subr.mxu0 0.0
    %117 = vmatpush1.msra.mxu0 0.0
    %118 = vmatprep.subr.mxu0 0.0
    %119 = vmatpush1.msra.mxu0 0.0
    %120 = vmatprep.subr.mxu0 0.0
    %121 = vmatpush1.msra.mxu0 0.0
    %122 = vmatprep.subr.mxu0 0.0
    %123 = vmatpush1.msra.mxu0 0.0
    %124 = vmatprep.subr.mxu0 0.0
    %125 = vmatpush1.msra.mxu0 0.0
    %126 = vmatprep.mubr.f32.mxu0 0.0
    %127 = vmatmul.mubr.f32.gmra.mrb[0].mxu0 %v51
    %v128 = vpop.f32.mrb[0].mxu0
    %v129 = vadd.f32 0.0, %v128
    %v130 = vpop.f32.mrb[0].mxu0
    %131 = vmatprep.mubr.f32.mxu0 0.0
    %132 = vmatmul.mubr.f32.gmra.mrb[0].mxu0 %v54
    %v133 = vpop.f32.mrb[0].mxu0
    %v134 = vadd.f32 0.0, %v133
    %v135 = vpop.f32.mrb[0].mxu0
    %136 = vmatprep.mubr.f32.mxu0 0.0
    %137 = vmatmul.mubr.f32.gmra.mrb[0].mxu0 %v57
    %v138 = vpop.f32.mrb[0].mxu0
    %v139 = vadd.f32 0.0, %v138
    %v140 = vpop.f32.mrb[0].mxu0
    %141 = vmatprep.mubr.f32.mxu0 0.0
    %142 = vmatmul.mubr.f32.gmra.mrb[0].mxu0 %v60
    %v143 = vpop.f32.mrb[0].mxu0
    %v144 = vadd.f32 0.0, %v143
    %v145 = vpop.f32.mrb[0].mxu0
    %146 = vdwg.mxu0
    %v147 = vadd.f32 %v33, %v129
    %v148 = vadd.f32 %v34, %v134
    %v149 = vadd.f32 %v35, %v139
    %v150 = vadd.f32 %v36, %v144
    %vm151 = vcmask 261120
    %152 = vst.msk [vmem:[#allocation2] sm:$0xff] %vm151, %v147
    %153 = vst.msk [vmem:[#allocation2 + $0x8] sm:$0xff] %vm151, %v148
    %154 = vst.msk [vmem:[#allocation2 + $0x10] sm:$0xff] %vm151, %v149
    %155 = vst.msk [vmem:[#allocation2 + $0x18] sm:$0xff] %vm151, %v150
    // Predicated region
    $region30: #{tpu_custom_call.1} parent=1 // pred_check
      %p156 = pneg %p24
    $region31: #{tpu_custom_call.1} parent=1 // pred_check_branch
      %158 = sbr.rel (%p156) target = $region33
    $region32: #{tpu_custom_call.1} parent=1 // pred_region
      %v159 = vld [vmem:[#allocation2] sm:$0xff]
      %v160 = vld [vmem:[#allocation2 + $0x8] sm:$0xff]
      %v161 = vld [vmem:[#allocation2 + $0x10] sm:$0xff]
      %v162 = vld [vmem:[#allocation2 + $0x18] sm:$0xff]
      %v163 = vld [vmem:[%s2] sm:$0x1]
      %v165 = vlaneseq
      %v166 = vshrl.u32 %v165, 7
      %v167 = vsub.s32 0, %v166
      %v168 = vrot.slane %v163, %v167
      %v170 = vadd.f32 %v159, %v168
      %v171 = vadd.f32 %v160, %v168
      %v172 = vadd.f32 %v161, %v168
      %v173 = vadd.f32 %v162, %v168
      %v174 = vld [vmem:[%s3] sm:$0xff]
      %v175 = vld [vmem:[%s3 + $0x8] sm:$0xff]
      %v176 = vld [vmem:[%s3 + $0x10] sm:$0xff]
      %v177 = vld [vmem:[%s3 + $0x18] sm:$0xff]
      %v178 = vadd.f32 %v170, %v174
      %v179 = vadd.f32 %v171, %v175
      %v180 = vadd.f32 %v172, %v176
      %v181 = vadd.f32 %v173, %v177
      %v182 = vsel %vm151, %v178, 0.0
      %183 = vadd.xlane.f32.xlu0 %v182
      %v184 = vpop.xlane.xlu0 %183
      %v185 = vsel %vm151, %v179, 0.0
      %186 = vadd.xlane.f32.xlu0 %v185
      %v187 = vpop.xlane.xlu0 %186
      %v188 = vsel %vm151, %v180, 0.0
      %189 = vadd.xlane.f32.xlu0 %v188
      %v190 = vpop.xlane.xlu0 %189
      %v191 = vsel %vm151, %v181, 0.0
      %192 = vadd.xlane.f32.xlu0 %v191
      %v193 = vpop.xlane.xlu0 %192
      %v194 = vrcp.pop 32.0
      %v195 = vmul.f32 %v184, %v194
      %v196 = vmul.f32 %v187, %v194
      %v197 = vmul.f32 %v190, %v194
      %v198 = vmul.f32 %v193, %v194
      %v199 = vsub.f32 %v178, %v195
      %v200 = vsub.f32 %v179, %v196
      %v201 = vsub.f32 %v180, %v197
      %v202 = vsub.f32 %v181, %v198
      %v203 = vmul.f32 %v199, %v199
      %v204 = vmul.f32 %v200, %v200
      %v205 = vmul.f32 %v201, %v201
      %v206 = vmul.f32 %v202, %v202
      %v207 = vsel %vm151, %v203, 0.0
      %208 = vadd.xlane.f32.xlu0 %v207
      %v209 = vpop.xlane.xlu0 %208
      %v210 = vsel %vm151, %v204, 0.0
      %211 = vadd.xlane.f32.xlu0 %v210
      %v212 = vpop.xlane.xlu0 %211
      %v213 = vsel %vm151, %v205, 0.0
      %214 = vadd.xlane.f32.xlu0 %v213
      %v215 = vpop.xlane.xlu0 %214
      %v216 = vsel %vm151, %v206, 0.0
      %217 = vadd.xlane.f32.xlu0 %v216
      %v218 = vpop.xlane.xlu0 %217
      %v219 = vmul.f32 %v209, %v194
      %v220 = vmul.f32 %v212, %v194
      %v221 = vmul.f32 %v215, %v194
      %v222 = vmul.f32 %v218, %v194
      %v223 = vadd.f32 %v219, 1e-12
      %v224 = vadd.f32 %v220, 1e-12
      %v225 = vadd.f32 %v221, 1e-12
      %v226 = vadd.f32 %v222, 1e-12
      %v227 = vrsqrt.pop %v223
      %v228 = vrsqrt.pop %v224
      %v229 = vrsqrt.pop %v225
      %v230 = vrsqrt.pop %v226
      %v231 = vmul.f32 %v199, %v227
      %v232 = vmul.f32 %v200, %v228
      %v233 = vmul.f32 %v201, %v229
      %v234 = vmul.f32 %v202, %v230
      %v235 = vld [vmem:[%s4] sm:$0x1]
      %v237 = vlaneseq
      %v238 = vshrl.u32 %v237, 7
      %v239 = vsub.s32 0, %v238
      %v240 = vrot.slane %v235, %v239
      %v242 = vmul.f32 %v231, %v240
      %v243 = vmul.f32 %v232, %v240
      %v244 = vmul.f32 %v233, %v240
      %v245 = vmul.f32 %v234, %v240
      %v246 = vld [vmem:[%s5] sm:$0x1]
      %v248 = vlaneseq
      %v249 = vshrl.u32 %v248, 7
      %v250 = vsub.s32 0, %v249
      %v251 = vrot.slane %v246, %v250
      %v253 = vadd.f32 %v242, %v251
      %v254 = vadd.f32 %v243, %v251
      %v255 = vadd.f32 %v244, %v251
      %v256 = vadd.f32 %v245, %v251
      %257 = vst.msk [vmem:[#allocation3] sm:$0xff] %vm151, %v253
      %258 = vst.msk [vmem:[#allocation3 + $0x8] sm:$0xff] %vm151, %v254
      %259 = vst.msk [vmem:[#allocation3 + $0x10] sm:$0xff] %vm151, %v255
      %260 = vst.msk [vmem:[#allocation3 + $0x18] sm:$0xff] %vm151, %v256
    $region33: #{tpu_custom_call.1} parent=1 // pred_fallthru
      _
    // Predicated region
    $region34: #{tpu_custom_call.1} parent=1 // pred_check
      _
    $region35: #{tpu_custom_call.1} parent=1 // pred_check_branch
      %262 = sbr.rel (0) target = $region37
    $region36: #{tpu_custom_call.1} parent=1 // pred_region
      %s264 = ssub.s32 512, 512
      %265 = vsyncadd [#allocation4], %s264
      %s266 = sshll.u32 [#allocation3], 4
      %s267 = int_to_ptr.vmem [resolvable:$true] %s266
      %272 = dma.vmem_to_hbm [thread:$0]  %s267, 512, %s6, [#allocation4], 128, 128, 8
    $region37: #{tpu_custom_call.1} parent=1 // pred_fallthru
      _
    // Predicated region
    $region38: #{tpu_custom_call.1} parent=1 // pred_check
      _
    $region39: #{tpu_custom_call.1} parent=1 // pred_check_branch
      %274 = sbr.rel (0) target = $region41
    $region40: #{tpu_custom_call.1} parent=1 // pred_region
      %275 = dma.done [#allocation4], 512
    $region41: #{tpu_custom_call.1} parent=1 // pred_fallthru
      _
    %276 = vsyncpa [#allocation4], 1

</llo_original>
